<compile_context>
chip_gen: v5e
topology: v5e:2x2
jax: 0.10.0
libtpu: 0.0.40
codegen_flags: <defaults>
</compile_context>

<pallas_src>
import jax
import jax.numpy as jnp
from jax.experimental import pallas as pl
from jax.experimental.pallas import tpu as pltpu

EMBEDDING_DIM = 8        # args['embeddingDim']
MAX_DOC_LEN = 16         # args['maxDocLength']
FILTERS = (2, 3, 4)      # args['filters']
FILTER_NUM_TOTAL = 12    # args['filterNum']  -> per-filter = 12 // 3 = 4
CLASS_SIZE = 5           # args['classSize']
DROP_OUT = 0.0           # args['dropOut'] == 0 -> dropout is identity (eval semantics)
BATCH = 2

FN = FILTER_NUM_TOTAL // len(FILTERS)                    # filters per conv = 4
F_TOTAL = FN * len(FILTERS)                              # 12
L_E = MAX_DOC_LEN * EMBEDDING_DIM                        # 128 (lane-dense activation width)
K_SIZES = tuple(EMBEDDING_DIM * fi for fi in FILTERS)    # (16, 24, 32)
P_SIZES = tuple(MAX_DOC_LEN - fi + 1 for fi in FILTERS)  # (15, 14, 13) valid conv positions

P_PAD = 16                                               # positions padded to a power of 2
F_PAD = 16                                               # filter lanes padded to 16
assert max(P_SIZES) <= P_PAD and (P_PAD & (P_PAD - 1)) == 0
assert F_TOTAL <= F_PAD
N_COL = P_PAD * F_PAD                                    # 256 conv-matmul output columns
assert N_COL % 128 == 0
# lane distances for the max-pool tree-reduce (positions live at lane stride F_PAD)
_POOL_DISTANCES = tuple(F_PAD << k for k in range(P_PAD.bit_length() - 1))  # (16,32,64,128)

B_TILE_MAX = 512                                         # docs per grid step (cap)


def tnlr_cnn_kernel(x_ref, w_ref, cb_ref, fc_ref, out_ref):
    """Fused conv-as-matmul + bias + ReLU + max-pool + FC + log_softmax for one batch tile."""
    # Conv for all 3 filter sizes / all positions as ONE bf16 MXU matmul, f32 accumulation:
    #   (B_TILE, 128) @ (128, 256); column p*16+f = filter f applied at token position p.
    a = x_ref[...].astype(jnp.bfloat16)
    s = jnp.dot(a, w_ref[...], preferred_element_type=jnp.float32)

    # One packed conv-bias row + ReLU.  Invalid (p, f) columns have zero weights and zero
    # bias -> exactly 0 after ReLU -> never beat the max below (valid ReLU outputs >= 0).
    s = jnp.maximum(s + cb_ref[...], 0.0)

    # Global max-pool over positions: lane tree-reduce with XLU rolls.  After the tree,
    # lane f (< F_PAD) holds max_p s[:, p*F_PAD + f].
    r = s
    for dist in _POOL_DISTANCES:
        r = jnp.maximum(r, pltpu.roll(r, shift=N_COL - dist, axis=1))
    pooled = r[:, :F_PAD]                       # (B_TILE, 16); lanes 12..15 are zero pads

    # Dropout(p=0.0) is identity.  TODO(synk): emit pltpu.prng_* masking only if dropOut > 0.

    # FC + numerically stable log_softmax (f32 throughout).
    logits = jnp.dot(pooled, fc_ref[:F_PAD, :], preferred_element_type=jnp.float32)
    logits = logits + fc_ref[F_PAD:F_PAD + 1, :]
    m = jnp.max(logits, axis=1, keepdims=True)
    z = logits - m
    lse = jnp.log(jnp.sum(jnp.exp(z), axis=1, keepdims=True))
    out_ref[...] = (z - lse).astype(out_ref.dtype)


def init_params(key):
    """Deterministic PyTorch-style uniform(-1/sqrt(fan_in), 1/sqrt(fan_in)) init."""
    params = {}
    keys = jax.random.split(key, 2 * len(FILTERS) + 2)
    for i, fi in enumerate(FILTERS):
        k = EMBEDDING_DIM * fi                  # Conv1d kernel size (in_channels = 1)
        bound = 1.0 / float(k) ** 0.5
        params[f"conv{i}_w"] = jax.random.uniform(
            keys[2 * i], (FN, k), jnp.float32, -bound, bound)
        params[f"conv{i}_b"] = jax.random.uniform(
            keys[2 * i + 1], (1, FN), jnp.float32, -bound, bound)
    bound = 1.0 / float(F_TOTAL) ** 0.5
    params["fc_w"] = jax.random.uniform(
        keys[-2], (CLASS_SIZE, F_TOTAL), jnp.float32, -bound, bound)
    params["fc_b"] = jax.random.uniform(
        keys[-1], (1, CLASS_SIZE), jnp.float32, -bound, bound)
    return params


def pack_params(params):
    """One-time weight packing (call once, outside the jitted forward).

    Returns:
      w_big   (128, 256) bf16 : conv-as-matmul weights; column p*F_PAD + f holds filter f's
              weights at rows p*E .. p*E + K_f - 1 (zero elsewhere; invalid columns all-zero).
      cbias   (1, 256)   f32  : matching conv bias row (zero for invalid columns).
      fc_pack (17, 5)    f32  : fc weight^T padded to 16 rows + fc bias row.
    """
    w_cols = jnp.zeros((L_E, P_PAD, F_PAD), jnp.float32)
    b_cols = jnp.zeros((P_PAD, F_PAD), jnp.float32)
    for g, (k_g, p_g) in enumerate(zip(K_SIZES, P_SIZES)):
        w_g = params[f"conv{g}_w"]                       # (FN, K_g)
        b_g = params[f"conv{g}_b"].reshape(FN)           # (FN,)
        for p in range(p_g):
            lo = EMBEDDING_DIM * p                       # window start in the flattened doc
            w_cols = w_cols.at[lo:lo + k_g, p, g * FN:(g + 1) * FN].set(w_g.T)
        b_cols = b_cols.at[:p_g, g * FN:(g + 1) * FN].set(
            jnp.broadcast_to(b_g, (p_g, FN)))
    w_big = w_cols.reshape(L_E, N_COL).astype(jnp.bfloat16)
    cbias = b_cols.reshape(1, N_COL)
    fc_w = jnp.zeros((F_PAD, CLASS_SIZE), jnp.float32).at[:F_TOTAL, :].set(params["fc_w"].T)
    fc_pack = jnp.concatenate([fc_w, params["fc_b"].reshape(1, CLASS_SIZE)], axis=0)
    return w_big, cbias, fc_pack


def _choose_b_tile(batch):
    """Largest tile <= B_TILE_MAX that still gives >= 2 grid steps when the batch allows it
    (the parallel grid axis is what feeds v7x's second TensorCore); multiple of 8 sublanes."""
    half = -(-batch // 2)
    tile = max(8, -(-half // 8) * 8)
    return min(B_TILE_MAX, tile)


@jax.jit
def tnlr_cnn_forward(x, packed):
    w_big, cbias, fc_pack = packed
    b = x.shape[0]
    b_tile = _choose_b_tile(b)
    b_pad = -(-b // b_tile) * b_tile
    n_blocks = b_pad // b_tile

    # Natural lane-dense activation layout: (B, L*E) = (B, 128).  reshape is metadata-only;
    # pad only for the batch remainder (padded rows produce finite garbage, sliced off below).
    x2d = x.reshape(b, L_E)
    if b_pad != b:
        x2d = jnp.pad(x2d, ((0, b_pad - b), (0, 0)))

    flops = 2 * b_pad * L_E * N_COL + 2 * b_pad * F_PAD * CLASS_SIZE
    bytes_accessed = (x2d.size * x2d.dtype.itemsize
                      + w_big.size * w_big.dtype.itemsize
                      + cbias.size * 4 + fc_pack.size * 4
                      + b_pad * CLASS_SIZE * 4)

    out = pl.pallas_call(
        tnlr_cnn_kernel,
        out_shape=jax.ShapeDtypeStruct((b_pad, CLASS_SIZE), jnp.float32),
        grid=(n_blocks,),
        in_specs=[
            # activations: one tile of b_tile docs per grid step (double-buffered by Pallas)
            pl.BlockSpec((b_tile, L_E), lambda i: (i, 0)),
            # packed weights stay VMEM-resident across the whole batch grid
            pl.BlockSpec((L_E, N_COL), lambda i: (0, 0)),
            pl.BlockSpec((1, N_COL), lambda i: (0, 0)),
            pl.BlockSpec((F_PAD + 1, CLASS_SIZE), lambda i: (0, 0)),
        ],
        out_specs=pl.BlockSpec((b_tile, CLASS_SIZE), lambda i: (i, 0)),
        compiler_params=pltpu.CompilerParams(
            dimension_semantics=("parallel",),           # shard batch tiles across TCs (v7x)
            vmem_limit_bytes=32 * 1024 * 1024),          # headroom; <= physical on v5e/v6e/v7x
        cost_estimate=pl.CostEstimate(
            flops=int(flops),
            transcendentals=int(b_pad * (CLASS_SIZE + 1)),
            bytes_accessed=int(bytes_accessed)),
    )(x2d, w_big, cbias, fc_pack)
    return out[:b]


def reference_forward(x, params):
    """Pure-JAX f32 reference mirroring the PyTorch forward (for the correctness check)."""
    feats = []
    for i, (fi, p_i) in enumerate(zip(FILTERS, P_SIZES)):
        u = jnp.concatenate([x[:, t:t + p_i, :] for t in range(fi)], axis=-1)   # (B,P_i,fi*E)
        s = jnp.einsum("bpk,fk->bpf", u, params[f"conv{i}_w"]) + params[f"conv{i}_b"]
        feats.append(jnp.max(jnp.maximum(s, 0.0), axis=1))
    h = jnp.concatenate(feats, axis=1)
    logits = h @ params["fc_w"].T + params["fc_b"]
    return jax.nn.log_softmax(logits, axis=1)


if __name__ == "__main__":
    key = jax.random.PRNGKey(0)
    pkey, xkey = jax.random.split(key)
    params = init_params(pkey)
    packed = pack_params(params)
    x = jax.random.normal(xkey, (BATCH, MAX_DOC_LEN, EMBEDDING_DIM), jnp.float32)

    out = jax.block_until_ready(tnlr_cnn_forward(x, packed))
    ref = reference_forward(x, params)

    assert out.shape == (BATCH, CLASS_SIZE)
    # bf16 MXU inputs with f32 accumulation -> loosened parity tolerance (per review).
    assert jnp.allclose(out, ref, atol=2e-2, rtol=2e-2)
    print("KERNEL_OK")
</pallas_src>

<mosaic_0001>
module attributes {stable_mosaic.version = 11 : i64} {
  func.func @tnlr_cnn_kernel(%arg0: i32, %arg1: memref<8x128xf32, #tpu.memory_space<vmem>>, %arg2: memref<128x256xbf16, #tpu.memory_space<vmem>>, %arg3: memref<1x256xf32, #tpu.memory_space<vmem>>, %arg4: memref<17x5xf32, #tpu.memory_space<vmem>>, %arg5: memref<8x5xf32, #tpu.memory_space<vmem>>) attributes {dimension_semantics = [#tpu.dimension_semantics<parallel>], iteration_bounds = array<i64: 1>, scalar_prefetch = 0 : i64, scratch_operands = 0 : i64, tpu.core_type = #tpu.core_type<tc>, window_params = [{transform_indices = @transform_0, window_bounds = array<i64: 8, 128>}, {pipeline_mode = #tpu.pipeline_mode<synchronous>, transform_indices = @transform_1, window_bounds = array<i64: 128, 256>}, {pipeline_mode = #tpu.pipeline_mode<synchronous>, transform_indices = @transform_2, window_bounds = array<i64: 1, 256>}, {pipeline_mode = #tpu.pipeline_mode<synchronous>, transform_indices = @transform_3, window_bounds = array<i64: 17, 5>}, {transform_indices = @transform_4, window_bounds = array<i64: 8, 5>}]} {
    %c0 = arith.constant 0 : index
    %c0_0 = arith.constant 0 : index
    %0 = vector.load %arg1[%c0, %c0_0] : memref<8x128xf32, #tpu.memory_space<vmem>>, vector<8x128xf32>
    %1 = arith.truncf %0 : vector<8x128xf32> to vector<8x128xbf16>
    %c0_1 = arith.constant 0 : index
    %c0_2 = arith.constant 0 : index
    %2 = vector.load %arg2[%c0_1, %c0_2] : memref<128x256xbf16, #tpu.memory_space<vmem>>, vector<128x256xbf16>
    %cst = arith.constant dense<0.000000e+00> : vector<8x256xf32>
    %3 = tpu.matmul %1, %2, %cst {dimension_numbers = #tpu.dot_dimension_numbers<[1], [0], [0], [1], [0, 0, 1, 1], [], []>} : vector<8x128xbf16>, vector<128x256xbf16>, vector<8x256xf32> -> vector<8x256xf32>
    %c0_3 = arith.constant 0 : index
    %c0_4 = arith.constant 0 : index
    %4 = vector.load %arg3[%c0_3, %c0_4] : memref<1x256xf32, #tpu.memory_space<vmem>>, vector<1x256xf32>
    %5 = vector.broadcast %4 : vector<1x256xf32> to vector<8x256xf32>
    %6 = arith.addf %3, %5 : vector<8x256xf32>
    %cst_5 = arith.constant 0.000000e+00 : f32
    %7 = vector.broadcast %cst_5 : f32 to vector<8x256xf32>
    %8 = arith.maximumf %6, %7 : vector<8x256xf32>
    %c240_i32 = arith.constant 240 : i32
    %9 = tpu.dynamic_rotate %8 by %c240_i32 dim 1 : vector<8x256xf32>, i32 -> vector<8x256xf32>
    %10 = arith.maximumf %8, %9 : vector<8x256xf32>
    %c224_i32 = arith.constant 224 : i32
    %11 = tpu.dynamic_rotate %10 by %c224_i32 dim 1 : vector<8x256xf32>, i32 -> vector<8x256xf32>
    %12 = arith.maximumf %10, %11 : vector<8x256xf32>
    %c192_i32 = arith.constant 192 : i32
    %13 = tpu.dynamic_rotate %12 by %c192_i32 dim 1 : vector<8x256xf32>, i32 -> vector<8x256xf32>
    %14 = arith.maximumf %12, %13 : vector<8x256xf32>
    %c128_i32 = arith.constant 128 : i32
    %15 = tpu.dynamic_rotate %14 by %c128_i32 dim 1 : vector<8x256xf32>, i32 -> vector<8x256xf32>
    %16 = arith.maximumf %14, %15 : vector<8x256xf32>
    %17 = vector.extract_strided_slice %16 {offsets = [0, 0], sizes = [8, 16], strides = [1, 1]} : vector<8x256xf32> to vector<8x16xf32>
    %c0_6 = arith.constant 0 : index
    %c0_7 = arith.constant 0 : index
    %18 = vector.load %arg4[%c0_6, %c0_7] : memref<17x5xf32, #tpu.memory_space<vmem>>, vector<16x5xf32>
    %cst_8 = arith.constant dense<0.000000e+00> : vector<8x5xf32>
    %19 = tpu.matmul %17, %18, %cst_8 {dimension_numbers = #tpu.dot_dimension_numbers<[1], [0], [0], [1], [0, 0, 1, 1], [], []>} : vector<8x16xf32>, vector<16x5xf32>, vector<8x5xf32> -> vector<8x5xf32>
    %c16 = arith.constant 16 : index
    %c0_9 = arith.constant 0 : index
    %20 = vector.load %arg4[%c16, %c0_9] : memref<17x5xf32, #tpu.memory_space<vmem>>, vector<1x5xf32>
    %21 = vector.broadcast %20 : vector<1x5xf32> to vector<8x5xf32>
    %22 = arith.addf %19, %21 : vector<8x5xf32>
    %cst_10 = arith.constant dense<0xFF800000> : vector<8xf32>
    %23 = vector.multi_reduction <maximumf>, %22, %cst_10 [1] : vector<8x5xf32> to vector<8xf32>
    %24 = vector.shape_cast %23 : vector<8xf32> to vector<8x1xf32>
    %25 = vector.broadcast %24 : vector<8x1xf32> to vector<8x5xf32>
    %26 = arith.subf %22, %25 : vector<8x5xf32>
    %27 = math.exp %26 : vector<8x5xf32>
    %cst_11 = arith.constant dense<0.000000e+00> : vector<8xf32>
    %28 = vector.multi_reduction <add>, %27, %cst_11 [1] : vector<8x5xf32> to vector<8xf32>
    %29 = vector.shape_cast %28 : vector<8xf32> to vector<8x1xf32>
    %30 = math.log %29 : vector<8x1xf32>
    %31 = vector.broadcast %30 : vector<8x1xf32> to vector<8x5xf32>
    %32 = arith.subf %26, %31 : vector<8x5xf32>
    %c0_12 = arith.constant 0 : index
    %c0_13 = arith.constant 0 : index
    %33 = vector.load %arg5[%c0_12, %c0_13] : memref<8x5xf32, #tpu.memory_space<vmem>>, vector<8x5xf32>
    tpu.vector_store %arg5[%c0_12, %c0_13], %32 {strides = array<i32>} : memref<8x5xf32, #tpu.memory_space<vmem>>, vector<8x5xf32>,
    return
  }
  func.func @transform_0(%arg0: i32) -> (i32, i32) {
    %c0_i32 = arith.constant 0 : i32
    %c0_i32_0 = arith.constant 0 : i32
    return %arg0, %c0_i32 : i32, i32
  }
  func.func @transform_1(%arg0: i32) -> (i32, i32) {
    %c0_i32 = arith.constant 0 : i32
    %c0_i32_0 = arith.constant 0 : i32
    %c0_i32_1 = arith.constant 0 : i32
    return %c0_i32, %c0_i32_0 : i32, i32
  }
  func.func @transform_2(%arg0: i32) -> (i32, i32) {
    %c0_i32 = arith.constant 0 : i32
    %c0_i32_0 = arith.constant 0 : i32
    %c0_i32_1 = arith.constant 0 : i32
    return %c0_i32, %c0_i32_0 : i32, i32
  }
  func.func @transform_3(%arg0: i32) -> (i32, i32) {
    %c0_i32 = arith.constant 0 : i32
    %c0_i32_0 = arith.constant 0 : i32
    %c0_i32_1 = arith.constant 0 : i32
    return %c0_i32, %c0_i32_0 : i32, i32
  }
  func.func @transform_4(%arg0: i32) -> (i32, i32) {
    %c0_i32 = arith.constant 0 : i32
    %c0_i32_0 = arith.constant 0 : i32
    return %arg0, %c0_i32 : i32, i32
  }
}

</mosaic_0001>

<llo_original>
// kernel: tnlr_cnn_forward.1
$region0: #{tnlr_cnn_forward.1}
  #allocation0 [shape = 'u32[]', space=smem, size = 0x4, offset = 0x4, fixed_abs, tag = 'smem constant byte address 0x4 - core index']
  #allocation1 [shape = 'u32[72,128]{1,0:T(1,128)}', space=vmem, size = 0x9000, scoped, tag = 'internal scratch']
  %s0 = inlined_call_operand.vmem [shape: f32[8,128], index: 0, kind: input, shape index: {}]
  %s1 = inlined_call_operand.hbm [shape: bf16[128,256], index: 1, kind: input, shape index: {}]
  %s2 = inlined_call_operand.vmem [shape: f32[1,256], index: 2, kind: input, shape index: {}]
  %s3 = inlined_call_operand.vmem [shape: f32[17,5], index: 3, kind: input, shape index: {}]
  %s4 = inlined_call_operand.vmem [shape: f32[8,5], index: 4, kind: output, shape index: {}]
  %s5 = sld [smem:[#allocation0]]
  $region30: #{tnlr_cnn_forward.1} parent=0
    _
  %s7 = ssub.s32 1, %s5
  %s8 = scalar_select 0, %s7, %s5
  $region1: #{tnlr_cnn_forward.1} parent=0
    #allocation2 [shape = 'u8[65536]{0}', space=vmem, size = 0x10000, scoped, tag = 'input window, operand 1, single buffered']
    #allocation3 [shape = 's32[1]{0}', space=sflag, size = 0x4, scoped, tag = 'scoped memory for tnlr_cnn_forward.1']
    %9 = vsyncpa [#allocation3], 0
    // Predicated region
    $region2: #{tnlr_cnn_forward.1} parent=1 // pred_check
      _
    $region3: #{tnlr_cnn_forward.1} parent=1 // pred_check_branch
      %11 = sbr.rel (0) target = $region5
    $region4: #{tnlr_cnn_forward.1} parent=1 // pred_region
      _
    $region5: #{tnlr_cnn_forward.1} parent=1 // pred_fallthru
      _
    // Predicated region
    $region6: #{tnlr_cnn_forward.1} parent=1 // pred_check
      _
    $region7: #{tnlr_cnn_forward.1} parent=1 // pred_check_branch
      %13 = sbr.rel (0) target = $region9
    $region8: #{tnlr_cnn_forward.1} parent=1 // pred_region
      %15 = vsyncadd [#allocation3], 0
      %s16 = sshll.u32 %s1, 4
      %s17 = int_to_ptr.hbm [resolvable:$true] %s16
      %s18 = sshll.u32 [#allocation2], 4
      %s19 = int_to_ptr.vmem [resolvable:$true] %s18
      %24 = dma.hbm_to_vmem [thread:$0]  %s17, 2048, %s19, [#allocation3], 128, 128, 8
    $region9: #{tnlr_cnn_forward.1} parent=1 // pred_fallthru
      _
    // Predicated region
    $region10: #{tnlr_cnn_forward.1} parent=1 // pred_check
      _
    $region11: #{tnlr_cnn_forward.1} parent=1 // pred_check_branch
      %26 = sbr.rel (0) target = $region13
    $region12: #{tnlr_cnn_forward.1} parent=1 // pred_region
      _
    $region13: #{tnlr_cnn_forward.1} parent=1 // pred_fallthru
      _
    // Predicated region
    $region14: #{tnlr_cnn_forward.1} parent=1 // pred_check
      _
    $region15: #{tnlr_cnn_forward.1} parent=1 // pred_check_branch
      %28 = sbr.rel (0) target = $region17
    $region16: #{tnlr_cnn_forward.1} parent=1 // pred_region
      _
    $region17: #{tnlr_cnn_forward.1} parent=1 // pred_fallthru
      _
    // Predicated region
    $region18: #{tnlr_cnn_forward.1} parent=1 // pred_check
      _
    $region19: #{tnlr_cnn_forward.1} parent=1 // pred_check_branch
      %30 = sbr.rel (0) target = $region21
    $region20: #{tnlr_cnn_forward.1} parent=1 // pred_region
      %32 = dma.done [#allocation3], 2048
    $region21: #{tnlr_cnn_forward.1} parent=1 // pred_fallthru
      _
    %v33 = vld [vmem:[%s0] sm:$0xff]
    %v34 = vpack.c.bf16 %v33, %v33
    %v35 = vld [vmem:[#allocation2] sm:$0xff]
    %v36 = vld [vmem:[#allocation2 + $0x8] sm:$0xff]
    %v37 = vld [vmem:[#allocation2 + $0x10] sm:$0xff]
    %v38 = vld [vmem:[#allocation2 + $0x18] sm:$0xff]
    %v39 = vld [vmem:[#allocation2 + $0x20] sm:$0xff]
    %v40 = vld [vmem:[#allocation2 + $0x28] sm:$0xff]
    %v41 = vld [vmem:[#allocation2 + $0x30] sm:$0xff]
    %v42 = vld [vmem:[#allocation2 + $0x38] sm:$0xff]
    %v43 = vld [vmem:[#allocation2 + $0x40] sm:$0xff]
    %v44 = vld [vmem:[#allocation2 + $0x48] sm:$0xff]
    %v45 = vld [vmem:[#allocation2 + $0x50] sm:$0xff]
    %v46 = vld [vmem:[#allocation2 + $0x58] sm:$0xff]
    %v47 = vld [vmem:[#allocation2 + $0x60] sm:$0xff]
    %v48 = vld [vmem:[#allocation2 + $0x68] sm:$0xff]
    %v49 = vld [vmem:[#allocation2 + $0x70] sm:$0xff]
    %v50 = vld [vmem:[#allocation2 + $0x78] sm:$0xff]
    %v51 = vld [vmem:[%s2] sm:$0x3]
    %v53 = vperm.slane %v51, 0
    %v54 = vperm.slane %v51, 1
    %v73 = vunpack.c.l.b16 %v35
    %v74 = vunpack.c.h.b16 %v35
    %v75 = vunpack.c.l.b16 %v36
    %v76 = vunpack.c.h.b16 %v36
    %v77 = vunpack.c.l.b16 %v37
    %v78 = vunpack.c.h.b16 %v37
    %v79 = vunpack.c.l.b16 %v38
    %v80 = vunpack.c.h.b16 %v38
    %v81 = vunpack.c.l.b16 %v39
    %v82 = vunpack.c.h.b16 %v39
    %v83 = vunpack.c.l.b16 %v40
    %v84 = vunpack.c.h.b16 %v40
    %v85 = vunpack.c.l.b16 %v41
    %v86 = vunpack.c.h.b16 %v41
    %v87 = vunpack.c.l.b16 %v42
    %v88 = vunpack.c.h.b16 %v42
    %v89 = vunpack.c.l.b16 %v43
    %v90 = vunpack.c.h.b16 %v43
    %v91 = vunpack.c.l.b16 %v44
    %v92 = vunpack.c.h.b16 %v44
    %v93 = vunpack.c.l.b16 %v45
    %v94 = vunpack.c.h.b16 %v45
    %v95 = vunpack.c.l.b16 %v46
    %v96 = vunpack.c.h.b16 %v46
    %v97 = vunpack.c.l.b16 %v47
    %v98 = vunpack.c.h.b16 %v47
    %v99 = vunpack.c.l.b16 %v48
    %v100 = vunpack.c.h.b16 %v48
    %v101 = vunpack.c.l.b16 %v49
    %v102 = vunpack.c.h.b16 %v49
    %v103 = vunpack.c.l.b16 %v50
    %v104 = vunpack.c.h.b16 %v50
    %v105 = vpack.c.b16 %v75, %v73
    %v106 = vpack.c.b16 %v76, %v74
    %v107 = vpack.c.b16 %v79, %v77
    %v108 = vpack.c.b16 %v80, %v78
    %v109 = vpack.c.b16 %v83, %v81
    %v110 = vpack.c.b16 %v84, %v82
    %v111 = vpack.c.b16 %v87, %v85
    %v112 = vpack.c.b16 %v88, %v86
    %v113 = vpack.c.b16 %v91, %v89
    %v114 = vpack.c.b16 %v92, %v90
    %v115 = vpack.c.b16 %v95, %v93
    %v116 = vpack.c.b16 %v96, %v94
    %v117 = vpack.c.b16 %v99, %v97
    %v118 = vpack.c.b16 %v100, %v98
    %v119 = vpack.c.b16 %v103, %v101
    %v120 = vpack.c.b16 %v104, %v102
    %137 = vmatpush.bf16.msra.mxu0 %v119
    %138 = vmatpush.bf16.msra.mxu0 %v117
    %139 = vmatpush.bf16.msra.mxu0 %v115
    %140 = vmatpush.bf16.msra.mxu0 %v113
    %141 = vmatpush.bf16.msra.mxu0 %v111
    %142 = vmatpush.bf16.msra.mxu0 %v109
    %143 = vmatpush.bf16.msra.mxu0 %v107
    %144 = vmatpush.bf16.msra.mxu0 %v105
    %145 = vmatmul.bf16.gmra.mxu0 %v34
    %v146 = vpop.f32.mrf.mxu0
    %v147 = vadd.f32 %v53, %v146
    %v148 = vpop.f32.mrf.mxu0
    %149 = vdwg.mxu0
    %150 = vmatpush.bf16.msra.mxu0 %v120
    %151 = vmatpush.bf16.msra.mxu0 %v118
    %152 = vmatpush.bf16.msra.mxu0 %v116
    %153 = vmatpush.bf16.msra.mxu0 %v114
    %154 = vmatpush.bf16.msra.mxu0 %v112
    %155 = vmatpush.bf16.msra.mxu0 %v110
    %156 = vmatpush.bf16.msra.mxu0 %v108
    %157 = vmatpush.bf16.msra.mxu0 %v106
    %158 = vmatmul.bf16.gmra.mxu0 %v34
    %v159 = vpop.f32.mrf.mxu0
    %v160 = vadd.f32 %v54, %v159
    %v161 = vpop.f32.mrf.mxu0
    %162 = vdwg.mxu0
    %v163 = vmax.f32 %v147, 0.0
    %v164 = vmax.f32 %v160, 0.0
    %165 = vrot.lane.b32.xlu0 %v163, 112
    %v166 = vpop.permute.xlu0 %165
    %167 = vrot.lane.b32.xlu0 %v164, 112
    %v168 = vpop.permute.xlu0 %167
    %v169 = vlaneseq
    %v170 = vand.u32 %v169, 127
    %vm171 = vcmp.lt.s32.totalorder %v170, 112
    %v172 = vsel %vm171, %v166, %v168
    %v173 = vsel %vm171, %v168, %v166
    %v174 = vmax.f32 %v163, %v172
    %v175 = vmax.f32 %v164, %v173
    %176 = vrot.lane.b32.xlu0 %v174, 96
    %v177 = vpop.permute.xlu0 %176
    %178 = vrot.lane.b32.xlu0 %v175, 96
    %v179 = vpop.permute.xlu0 %178
    %vm180 = vcmp.lt.s32.totalorder %v170, 96
    %v181 = vsel %vm180, %v177, %v179
    %v182 = vsel %vm180, %v179, %v177
    %v183 = vmax.f32 %v174, %v181
    %v184 = vmax.f32 %v175, %v182
    %185 = vrot.lane.b32.xlu0 %v183, 64
    %v186 = vpop.permute.xlu0 %185
    %187 = vrot.lane.b32.xlu0 %v184, 64
    %v188 = vpop.permute.xlu0 %187
    %vm189 = vcmp.lt.s32.totalorder %v170, 64
    %v190 = vsel %vm189, %v186, %v188
    %v191 = vsel %vm189, %v188, %v186
    %v192 = vmax.f32 %v183, %v190
    %v193 = vmax.f32 %v184, %v191
    %v194 = vmax.f32 %v192, %v193
    %v195 = vld [vmem:[%s3] sm:$0xff]
    %v196 = vld [vmem:[%s3 + $0x8] sm:$0xff]
    %v197 = vld [vmem:[%s3 + $0x10] sm:$0x1]
    %v198 = vperm.slane %v197, 0
    %vm199 = vcmask 130048
    %v201 = vsel %vm199, %v194, 0
    %203 = vmatpush.msra.mxu0 0.0
    %204 = vmatpush.msra.mxu0 0.0
    %205 = vmatpush.msra.mxu0 0.0
    %206 = vmatpush.msra.mxu0 0.0
    %207 = vmatpush.msra.mxu0 0.0
    %208 = vmatpush.msra.mxu0 0.0
    %209 = vmatpush.msra.mxu0 0.0
    %210 = vmatpush.msra.mxu0 0.0
    %211 = vmatpush.msra.mxu0 0.0
    %212 = vmatpush.msra.mxu0 0.0
    %213 = vmatpush.msra.mxu0 0.0
    %214 = vmatpush.msra.mxu0 0.0
    %215 = vmatpush.msra.mxu0 0.0
    %216 = vmatpush.msra.mxu0 0.0
    %217 = vmatpush.msra.mxu0 %v196
    %218 = vmatpush.msra.mxu0 %v195
    %219 = vmatmul.f32.gmra.mxu0 %v201
    %v220 = vpop.f32.mrf.mxu0
    %v221 = vadd.f32 %v198, %v220
    %222 = vdwg.mxu0
    %vm223 = vcmask 39936
    %v224 = vsel %vm223, %v221, -inf
    %225 = vmax.xlane.f32.xlu0 %v224
    %v226 = vpop.xlane.xlu0 %225
    %v227 = vsub.f32 %v221, %v226
    %v228 = vmul.f32 %v227, 1.442695
    %v229 = vpow.pop %v228
    %v230 = vsel %vm223, %v229, 0.0
    %231 = vadd.xlane.f32.xlu0 %v230
    %v232 = vpop.xlane.xlu0 %231
    %v233 = vlog2.pop %v232
    %v234 = vmul.f32 %v233, 0.6931472
    %v235 = vsub.f32 %v227, %v234
    %236 = vst.msk [vmem:[%s4] sm:$0xff] %vm223, %v235
    // Predicated region
    $region22: #{tnlr_cnn_forward.1} parent=1 // pred_check
      _
    $region23: #{tnlr_cnn_forward.1} parent=1 // pred_check_branch
      %238 = sbr.rel (0) target = $region25
    $region24: #{tnlr_cnn_forward.1} parent=1 // pred_region
      _
    $region25: #{tnlr_cnn_forward.1} parent=1 // pred_fallthru
      _
    // Predicated region
    $region26: #{tnlr_cnn_forward.1} parent=1 // pred_check
      _
    $region27: #{tnlr_cnn_forward.1} parent=1 // pred_check_branch
      %240 = sbr.rel (0) target = $region29
    $region28: #{tnlr_cnn_forward.1} parent=1 // pred_region
      _
    $region29: #{tnlr_cnn_forward.1} parent=1 // pred_fallthru
      _
    %241 = vsyncpa [#allocation3], 1

</llo_original>
